<compile_context>
chip_gen: v7x
topology: tpu7x:2x2x1
jax: 0.10.0
libtpu: 0.0.40
codegen_flags: <defaults>
</compile_context>

<pallas_src>
import functools

import jax
import jax.numpy as jnp
from jax.experimental import pallas as pl
from jax.experimental.pallas import tpu as pltpu


def _round_up(n, m):
    return ((n + m - 1) // m) * m


def qvalue_kernel(xt_ref, at_ref, cmd_ref, w1x_ref, w1a_ref, b1_ref,
                  w2_ref, b2_ref, w3_ref, b3_ref, out_ref):
    """Fused MLP + head-select on one batch tile (feature-major layout).

    xt_ref : (obs_dim, Bt)     f32   observations, batch on lanes
    at_ref : (nb_actions, Bt)  f32   actions, batch on lanes
    cmd_ref: (1, Bt)           i32   command in {0, 1, 2}
    w1x_ref: (64, obs_dim)     f32   fc1 weight columns for obs   (torch layout)
    w1a_ref: (64, nb_actions)  f32   fc1 weight columns for action
    b1_ref : (64, 1)           f32
    w2_ref : (64, 64)          f32
    b2_ref : (64, 1)           f32
    w3_ref : (3, 64)           f32   three heads fused (left, straight, right)
    b3_ref : (3, 1)            f32
    out_ref: (1, Bt)           f32   selected Q-value per batch lane
    """
    # fc1 over the (virtual) concat [x, a]:  W1 @ [x;a] == W1x @ x + W1a @ a
    h1 = jnp.dot(w1x_ref[...], xt_ref[...], preferred_element_type=jnp.float32)
    h1 = h1 + jnp.dot(w1a_ref[...], at_ref[...],
                      preferred_element_type=jnp.float32)
    h1 = jnp.maximum(h1 + b1_ref[...], 0.0)                  # (64, Bt)

    # fc2 + relu
    h2 = jnp.dot(w2_ref[...], h1, preferred_element_type=jnp.float32)
    h2 = jnp.maximum(h2 + b2_ref[...], 0.0)                  # (64, Bt)

    # three heads at once: (3, Bt)
    heads = jnp.dot(w3_ref[...], h2, preferred_element_type=jnp.float32)
    heads = heads + b3_ref[...]

    # torch.gather over the stacked heads as a pure-VPU per-lane select chain
    # (no cross-lane reduce, no one-hot matmul).
    cmd = cmd_ref[...]                                        # (1, Bt) int32
    out_ref[...] = jnp.where(
        cmd == 0, heads[0:1, :],
        jnp.where(cmd == 1, heads[1:2, :], heads[2:3, :]))


@functools.partial(jax.jit, static_argnames=("b_tile",))
def qvalue_forward(x, command, a, params, *, b_tile=1024):
    """x: (B, obs_dim) f32, command: (B,) int in {0,1,2}, a: (B, nb_actions) f32.

    Weights are in torch orientation (out_features, in_features).
    Returns the selected Q-value, shape (B, 1).
    """
    w1, b1, w2, b2, w3, b3 = params
    B, obs_dim = x.shape
    nb_actions = a.shape[1]
    hidden = w1.shape[0]

    # Split fc1's weight so no concatenated activation is ever materialized.
    w1x = w1[:, :obs_dim]                    # (64, obs_dim)
    w1a = w1[:, obs_dim:]                    # (64, nb_actions)

    # Feature-major streams: batch on the lane axis.
    xt = x.astype(jnp.float32).T             # (obs_dim, B)
    at = a.astype(jnp.float32).T             # (nb_actions, B)
    cmdt = command.reshape(1, -1).astype(jnp.int32)   # (1, B)

    # Lane-aligned batch tile; pad batch so every grid step is a full block.
    bt = _round_up(min(b_tile, _round_up(B, 128)), 128)
    b_pad = _round_up(B, bt)
    if b_pad != B:
        pad = b_pad - B
        xt = jnp.pad(xt, ((0, 0), (0, pad)))
        at = jnp.pad(at, ((0, 0), (0, pad)))
        cmdt = jnp.pad(cmdt, ((0, 0), (0, pad)))

    grid = (b_pad // bt,)

    # Batch-tiled activation streams (block index along the lane axis).
    xt_spec = pl.BlockSpec((obs_dim, bt), lambda i: (0, i))
    at_spec = pl.BlockSpec((nb_actions, bt), lambda i: (0, i))
    cmd_spec = pl.BlockSpec((1, bt), lambda i: (0, i))
    out_spec = pl.BlockSpec((1, bt), lambda i: (0, i))

    # Weights/biases: full array, constant block index -> DMA'd once, resident.
    def const_spec(shape):
        return pl.BlockSpec(shape, lambda i: (0, 0))

    out_pad = pl.pallas_call(
        qvalue_kernel,
        out_shape=jax.ShapeDtypeStruct((1, b_pad), jnp.float32),
        grid_spec=pltpu.PrefetchScalarGridSpec(
            num_scalar_prefetch=0,
            grid=grid,
            in_specs=[
                xt_spec,
                at_spec,
                cmd_spec,
                const_spec((hidden, obs_dim)),
                const_spec((hidden, nb_actions)),
                const_spec((hidden, 1)),
                const_spec((hidden, hidden)),
                const_spec((hidden, 1)),
                const_spec((3, hidden)),
                const_spec((3, 1)),
            ],
            out_specs=out_spec,
        ),
        compiler_params=pltpu.CompilerParams(
            dimension_semantics=("parallel",)),
    )(xt, at, cmdt, w1x, w1a, b1.reshape(-1, 1), w2, b2.reshape(-1, 1),
      w3, b3.reshape(-1, 1))

    return out_pad[0, :B].reshape(-1, 1)


def init_params(key, obs_dim, nb_actions=2, hidden=64):
    """Deterministic synthetic init mirroring the torch module.

    Weights are stored in torch orientation (out_features, in_features).
    fc1/fc2: He (kaiming) normal; heads: Xavier uniform; biases:
    uniform(-1/sqrt(fan_in), 1/sqrt(fan_in)) like torch.nn.Linear defaults.
    """
    d_in = obs_dim + nb_actions
    keys = jax.random.split(key, 10)

    def he_normal(k, out_f, in_f):
        std = jnp.sqrt(2.0 / in_f)
        return jax.random.normal(k, (out_f, in_f), jnp.float32) * std

    def xavier_uniform(k, out_f, in_f):
        lim = jnp.sqrt(6.0 / (in_f + out_f))
        return jax.random.uniform(k, (out_f, in_f), jnp.float32, -lim, lim)

    def bias(k, in_f, out_f):
        lim = 1.0 / jnp.sqrt(in_f)
        return jax.random.uniform(k, (out_f,), jnp.float32, -lim, lim)

    w1 = he_normal(keys[0], hidden, d_in)
    b1 = bias(keys[1], d_in, hidden)
    w2 = he_normal(keys[2], hidden, hidden)
    b2 = bias(keys[3], hidden, hidden)
    # three (1, 64) heads fused into (3, 64): rows = [left, straight, right]
    w3 = jnp.concatenate([xavier_uniform(keys[4], 1, hidden),
                          xavier_uniform(keys[5], 1, hidden),
                          xavier_uniform(keys[6], 1, hidden)], axis=0)
    b3 = jnp.concatenate([bias(keys[7], hidden, 1),
                          bias(keys[8], hidden, 1),
                          bias(keys[9], hidden, 1)], axis=0)
    return (w1, b1, w2, b2, w3, b3)


def qvalue_reference(x, command, a, params):
    """Pure-JAX reference matching the PyTorch semantics exactly."""
    w1, b1, w2, b2, w3, b3 = params
    xa = jnp.concatenate([x, a], axis=1)
    h1 = jnp.maximum(xa @ w1.T + b1, 0.0)
    h2 = jnp.maximum(h1 @ w2.T + b2, 0.0)
    heads = h2 @ w3.T + b3                                 # (B, 3)
    stacked = jnp.transpose(heads)[:, :, None]             # (3, B, 1)
    idx = command.reshape(1, -1, 1)
    gathered = jnp.take_along_axis(stacked, idx, axis=0)   # (1, B, 1)
    return gathered.reshape(-1, 1)


if __name__ == "__main__":
    key = jax.random.PRNGKey(0)
    k_param, k_x, k_a, k_c = jax.random.split(key, 4)

    B, obs_dim, nb_actions = 8, 16, 2
    params = init_params(k_param, obs_dim, nb_actions)

    x = jax.random.normal(k_x, (B, obs_dim), jnp.float32)
    a = jax.random.normal(k_a, (B, nb_actions), jnp.float32)
    command = jax.random.randint(k_c, (B,), 0, 3, jnp.int32)

    out = jax.block_until_ready(qvalue_forward(x, command, a, params))
    ref = qvalue_reference(x, command, a, params)
    assert out.shape == (B, 1), out.shape
    assert jnp.allclose(out, ref, atol=1e-5, rtol=1e-5), (out, ref)

    # Also exercise a batch that forces multiple grid steps + padding.
    B2 = 1000
    x2 = jax.random.normal(k_x, (B2, obs_dim), jnp.float32)
    a2 = jax.random.normal(k_a, (B2, nb_actions), jnp.float32)
    c2 = jax.random.randint(k_c, (B2,), 0, 3, jnp.int32)
    out2 = jax.block_until_ready(qvalue_forward(x2, c2, a2, params, b_tile=256))
    ref2 = qvalue_reference(x2, c2, a2, params)
    assert out2.shape == (B2, 1), out2.shape
    assert jnp.allclose(out2, ref2, atol=1e-4, rtol=1e-4)

    print("KERNEL_OK")
</pallas_src>

<mosaic_0001>
module attributes {stable_mosaic.version = 11 : i64} {
  func.func @qvalue_kernel(%arg0: i32, %arg1: memref<16x128xf32, #tpu.memory_space<vmem>>, %arg2: memref<2x128xf32, #tpu.memory_space<vmem>>, %arg3: memref<1x128xi32, #tpu.memory_space<vmem>>, %arg4: memref<64x16xf32, #tpu.memory_space<vmem>>, %arg5: memref<64x2xf32, #tpu.memory_space<vmem>>, %arg6: memref<64x1xf32, #tpu.memory_space<vmem>>, %arg7: memref<64x64xf32, #tpu.memory_space<vmem>>, %arg8: memref<64x1xf32, #tpu.memory_space<vmem>>, %arg9: memref<3x64xf32, #tpu.memory_space<vmem>>, %arg10: memref<3x1xf32, #tpu.memory_space<vmem>>, %arg11: memref<1x128xf32, #tpu.memory_space<vmem>>) attributes {dimension_semantics = [#tpu.dimension_semantics<parallel>], iteration_bounds = array<i64: 1>, scalar_prefetch = 0 : i64, scratch_operands = 0 : i64, tpu.core_type = #tpu.core_type<tc>, window_params = [{transform_indices = @transform_0, window_bounds = array<i64: 16, 128>}, {transform_indices = @transform_1, window_bounds = array<i64: 2, 128>}, {transform_indices = @transform_2, window_bounds = array<i64: 1, 128>}, {pipeline_mode = #tpu.pipeline_mode<synchronous>, transform_indices = @transform_3, window_bounds = array<i64: 64, 16>}, {pipeline_mode = #tpu.pipeline_mode<synchronous>, transform_indices = @transform_4, window_bounds = array<i64: 64, 2>}, {pipeline_mode = #tpu.pipeline_mode<synchronous>, transform_indices = @transform_5, window_bounds = array<i64: 64, 1>}, {pipeline_mode = #tpu.pipeline_mode<synchronous>, transform_indices = @transform_6, window_bounds = array<i64: 64, 64>}, {pipeline_mode = #tpu.pipeline_mode<synchronous>, transform_indices = @transform_7, window_bounds = array<i64: 64, 1>}, {pipeline_mode = #tpu.pipeline_mode<synchronous>, transform_indices = @transform_8, window_bounds = array<i64: 3, 64>}, {pipeline_mode = #tpu.pipeline_mode<synchronous>, transform_indices = @transform_9, window_bounds = array<i64: 3, 1>}, {transform_indices = @transform_10, window_bounds = array<i64: 1, 128>}]} {
    %c0 = arith.constant 0 : index
    %c0_0 = arith.constant 0 : index
    %0 = vector.load %arg4[%c0, %c0_0] : memref<64x16xf32, #tpu.memory_space<vmem>>, vector<64x16xf32>
    %c0_1 = arith.constant 0 : index
    %c0_2 = arith.constant 0 : index
    %1 = vector.load %arg1[%c0_1, %c0_2] : memref<16x128xf32, #tpu.memory_space<vmem>>, vector<16x128xf32>
    %cst = arith.constant dense<0.000000e+00> : vector<64x128xf32>
    %2 = tpu.matmul %0, %1, %cst {dimension_numbers = #tpu.dot_dimension_numbers<[1], [0], [0], [1], [0, 0, 1, 1], [], []>} : vector<64x16xf32>, vector<16x128xf32>, vector<64x128xf32> -> vector<64x128xf32>
    %c0_3 = arith.constant 0 : index
    %c0_4 = arith.constant 0 : index
    %3 = vector.load %arg5[%c0_3, %c0_4] : memref<64x2xf32, #tpu.memory_space<vmem>>, vector<64x2xf32>
    %c0_5 = arith.constant 0 : index
    %c0_6 = arith.constant 0 : index
    %4 = vector.load %arg2[%c0_5, %c0_6] : memref<2x128xf32, #tpu.memory_space<vmem>>, vector<2x128xf32>
    %cst_7 = arith.constant dense<0.000000e+00> : vector<64x128xf32>
    %5 = tpu.matmul %3, %4, %cst_7 {dimension_numbers = #tpu.dot_dimension_numbers<[1], [0], [0], [1], [0, 0, 1, 1], [], []>} : vector<64x2xf32>, vector<2x128xf32>, vector<64x128xf32> -> vector<64x128xf32>
    %6 = arith.addf %2, %5 : vector<64x128xf32>
    %c0_8 = arith.constant 0 : index
    %c0_9 = arith.constant 0 : index
    %7 = vector.load %arg6[%c0_8, %c0_9] : memref<64x1xf32, #tpu.memory_space<vmem>>, vector<64x1xf32>
    %8 = vector.broadcast %7 : vector<64x1xf32> to vector<64x128xf32>
    %9 = arith.addf %6, %8 : vector<64x128xf32>
    %cst_10 = arith.constant 0.000000e+00 : f32
    %10 = vector.broadcast %cst_10 : f32 to vector<64x128xf32>
    %11 = arith.maximumf %9, %10 : vector<64x128xf32>
    %c0_11 = arith.constant 0 : index
    %c0_12 = arith.constant 0 : index
    %12 = vector.load %arg7[%c0_11, %c0_12] : memref<64x64xf32, #tpu.memory_space<vmem>>, vector<64x64xf32>
    %cst_13 = arith.constant dense<0.000000e+00> : vector<64x128xf32>
    %13 = tpu.matmul %12, %11, %cst_13 {dimension_numbers = #tpu.dot_dimension_numbers<[1], [0], [0], [1], [0, 0, 1, 1], [], []>} : vector<64x64xf32>, vector<64x128xf32>, vector<64x128xf32> -> vector<64x128xf32>
    %c0_14 = arith.constant 0 : index
    %c0_15 = arith.constant 0 : index
    %14 = vector.load %arg8[%c0_14, %c0_15] : memref<64x1xf32, #tpu.memory_space<vmem>>, vector<64x1xf32>
    %15 = vector.broadcast %14 : vector<64x1xf32> to vector<64x128xf32>
    %16 = arith.addf %13, %15 : vector<64x128xf32>
    %cst_16 = arith.constant 0.000000e+00 : f32
    %17 = vector.broadcast %cst_16 : f32 to vector<64x128xf32>
    %18 = arith.maximumf %16, %17 : vector<64x128xf32>
    %c0_17 = arith.constant 0 : index
    %c0_18 = arith.constant 0 : index
    %19 = vector.load %arg9[%c0_17, %c0_18] : memref<3x64xf32, #tpu.memory_space<vmem>>, vector<3x64xf32>
    %cst_19 = arith.constant dense<0.000000e+00> : vector<3x128xf32>
    %20 = tpu.matmul %19, %18, %cst_19 {dimension_numbers = #tpu.dot_dimension_numbers<[1], [0], [0], [1], [0, 0, 1, 1], [], []>} : vector<3x64xf32>, vector<64x128xf32>, vector<3x128xf32> -> vector<3x128xf32>
    %c0_20 = arith.constant 0 : index
    %c0_21 = arith.constant 0 : index
    %21 = vector.load %arg10[%c0_20, %c0_21] : memref<3x1xf32, #tpu.memory_space<vmem>>, vector<3x1xf32>
    %22 = vector.broadcast %21 : vector<3x1xf32> to vector<3x128xf32>
    %23 = arith.addf %20, %22 : vector<3x128xf32>
    %c0_22 = arith.constant 0 : index
    %c0_23 = arith.constant 0 : index
    %24 = vector.load %arg3[%c0_22, %c0_23] : memref<1x128xi32, #tpu.memory_space<vmem>>, vector<1x128xi32>
    %c0_i32 = arith.constant 0 : i32
    %25 = vector.broadcast %c0_i32 : i32 to vector<1x128xi32>
    %26 = arith.cmpi eq, %24, %25 : vector<1x128xi32>
    %27 = vector.extract_strided_slice %23 {offsets = [0, 0], sizes = [1, 128], strides = [1, 1]} : vector<3x128xf32> to vector<1x128xf32>
    %c1_i32 = arith.constant 1 : i32
    %28 = vector.broadcast %c1_i32 : i32 to vector<1x128xi32>
    %29 = arith.cmpi eq, %24, %28 : vector<1x128xi32>
    %30 = vector.extract_strided_slice %23 {offsets = [1, 0], sizes = [1, 128], strides = [1, 1]} : vector<3x128xf32> to vector<1x128xf32>
    %31 = vector.extract_strided_slice %23 {offsets = [2, 0], sizes = [1, 128], strides = [1, 1]} : vector<3x128xf32> to vector<1x128xf32>
    %32 = arith.select %29, %30, %31 : vector<1x128xi1>, vector<1x128xf32>
    %33 = arith.select %26, %27, %32 : vector<1x128xi1>, vector<1x128xf32>
    %c0_24 = arith.constant 0 : index
    %c0_25 = arith.constant 0 : index
    %34 = vector.load %arg11[%c0_24, %c0_25] : memref<1x128xf32, #tpu.memory_space<vmem>>, vector<1x128xf32>
    tpu.vector_store %arg11[%c0_24, %c0_25], %33 {strides = array<i32>} : memref<1x128xf32, #tpu.memory_space<vmem>>, vector<1x128xf32>,
    return
  }
  func.func @transform_0(%arg0: i32) -> (i32, i32) {
    %c0_i32 = arith.constant 0 : i32
    %c0_i32_0 = arith.constant 0 : i32
    return %c0_i32, %arg0 : i32, i32
  }
  func.func @transform_1(%arg0: i32) -> (i32, i32) {
    %c0_i32 = arith.constant 0 : i32
    %c0_i32_0 = arith.constant 0 : i32
    return %c0_i32, %arg0 : i32, i32
  }
  func.func @transform_2(%arg0: i32) -> (i32, i32) {
    %c0_i32 = arith.constant 0 : i32
    %c0_i32_0 = arith.constant 0 : i32
    return %c0_i32, %arg0 : i32, i32
  }
  func.func @transform_3(%arg0: i32) -> (i32, i32) {
    %c0_i32 = arith.constant 0 : i32
    %c0_i32_0 = arith.constant 0 : i32
    %c0_i32_1 = arith.constant 0 : i32
    return %c0_i32, %c0_i32_0 : i32, i32
  }
  func.func @transform_4(%arg0: i32) -> (i32, i32) {
    %c0_i32 = arith.constant 0 : i32
    %c0_i32_0 = arith.constant 0 : i32
    %c0_i32_1 = arith.constant 0 : i32
    return %c0_i32, %c0_i32_0 : i32, i32
  }
  func.func @transform_5(%arg0: i32) -> (i32, i32) {
    %c0_i32 = arith.constant 0 : i32
    %c0_i32_0 = arith.constant 0 : i32
    %c0_i32_1 = arith.constant 0 : i32
    return %c0_i32, %c0_i32_0 : i32, i32
  }
  func.func @transform_6(%arg0: i32) -> (i32, i32) {
    %c0_i32 = arith.constant 0 : i32
    %c0_i32_0 = arith.constant 0 : i32
    %c0_i32_1 = arith.constant 0 : i32
    return %c0_i32, %c0_i32_0 : i32, i32
  }
  func.func @transform_7(%arg0: i32) -> (i32, i32) {
    %c0_i32 = arith.constant 0 : i32
    %c0_i32_0 = arith.constant 0 : i32
    %c0_i32_1 = arith.constant 0 : i32
    return %c0_i32, %c0_i32_0 : i32, i32
  }
  func.func @transform_8(%arg0: i32) -> (i32, i32) {
    %c0_i32 = arith.constant 0 : i32
    %c0_i32_0 = arith.constant 0 : i32
    %c0_i32_1 = arith.constant 0 : i32
    return %c0_i32, %c0_i32_0 : i32, i32
  }
  func.func @transform_9(%arg0: i32) -> (i32, i32) {
    %c0_i32 = arith.constant 0 : i32
    %c0_i32_0 = arith.constant 0 : i32
    %c0_i32_1 = arith.constant 0 : i32
    return %c0_i32, %c0_i32_0 : i32, i32
  }
  func.func @transform_10(%arg0: i32) -> (i32, i32) {
    %c0_i32 = arith.constant 0 : i32
    %c0_i32_0 = arith.constant 0 : i32
    return %c0_i32, %arg0 : i32, i32
  }
}

</mosaic_0001>

<llo_original>
// kernel: qvalue_forward.1
$region0: #{qvalue_forward.1}
  #allocation0 [shape = 'u32[]', space=smem, size = 0x4, offset = 0x4, fixed_abs, tag = 'smem constant byte address 0x4 - core index']
  #allocation1 [shape = 'u32[144,128]{1,0:T(1,128)}', space=vmem, size = 0x12000, scoped, tag = 'internal scratch']
  %s0 = inlined_call_operand.vmem [shape: f32[16,128], index: 0, kind: input, shape index: {}]
  %s1 = inlined_call_operand.vmem [shape: f32[2,128], index: 1, kind: input, shape index: {}]
  %s2 = inlined_call_operand.vmem [shape: s32[1,128], index: 2, kind: input, shape index: {}]
  %s3 = inlined_call_operand.vmem [shape: f32[64,16], index: 3, kind: input, shape index: {}]
  %s4 = inlined_call_operand.vmem [shape: f32[64,2], index: 4, kind: input, shape index: {}]
  %s5 = inlined_call_operand.vmem [shape: f32[64,1], index: 5, kind: input, shape index: {}]
  %s6 = inlined_call_operand.vmem [shape: f32[64,64], index: 6, kind: input, shape index: {}]
  %s7 = inlined_call_operand.vmem [shape: f32[64,1], index: 7, kind: input, shape index: {}]
  %s8 = inlined_call_operand.vmem [shape: f32[3,64], index: 8, kind: input, shape index: {}]
  %s9 = inlined_call_operand.vmem [shape: f32[3,1], index: 9, kind: input, shape index: {}]
  %s10 = inlined_call_operand.vmem [shape: f32[1,128], index: 10, kind: output, shape index: {}]
  %s11 = sld [smem:[#allocation0]]
  $region50: #{qvalue_forward.1} parent=0
    _
  %s13 = ssub.s32 1, %s11
  %s14 = scalar_select 0, %s13, %s11
  // Predicated region
  $region2: #{qvalue_forward.1} parent=0 // pred_check
    _
  $region3: #{qvalue_forward.1} parent=0 // pred_check_branch
    %16 = sbr.rel (0) target = $region5
  $region4: #{qvalue_forward.1} parent=0 // pred_region
    _
  $region5: #{qvalue_forward.1} parent=0 // pred_fallthru
    _
  // Predicated region
  $region6: #{qvalue_forward.1} parent=0 // pred_check
    _
  $region7: #{qvalue_forward.1} parent=0 // pred_check_branch
    %18 = sbr.rel (0) target = $region9
  $region8: #{qvalue_forward.1} parent=0 // pred_region
    _
  $region9: #{qvalue_forward.1} parent=0 // pred_fallthru
    _
  // Predicated region
  $region10: #{qvalue_forward.1} parent=0 // pred_check
    _
  $region11: #{qvalue_forward.1} parent=0 // pred_check_branch
    %20 = sbr.rel (0) target = $region13
  $region12: #{qvalue_forward.1} parent=0 // pred_region
    _
  $region13: #{qvalue_forward.1} parent=0 // pred_fallthru
    _
  // Predicated region
  $region14: #{qvalue_forward.1} parent=0 // pred_check
    _
  $region15: #{qvalue_forward.1} parent=0 // pred_check_branch
    %22 = sbr.rel (0) target = $region17
  $region16: #{qvalue_forward.1} parent=0 // pred_region
    _
  $region17: #{qvalue_forward.1} parent=0 // pred_fallthru
    _
  // Predicated region
  $region18: #{qvalue_forward.1} parent=0 // pred_check
    _
  $region19: #{qvalue_forward.1} parent=0 // pred_check_branch
    %24 = sbr.rel (0) target = $region21
  $region20: #{qvalue_forward.1} parent=0 // pred_region
    _
  $region21: #{qvalue_forward.1} parent=0 // pred_fallthru
    _
  // Predicated region
  $region22: #{qvalue_forward.1} parent=0 // pred_check
    _
  $region23: #{qvalue_forward.1} parent=0 // pred_check_branch
    %26 = sbr.rel (0) target = $region25
  $region24: #{qvalue_forward.1} parent=0 // pred_region
    _
  $region25: #{qvalue_forward.1} parent=0 // pred_fallthru
    _
  // Predicated region
  $region26: #{qvalue_forward.1} parent=0 // pred_check
    _
  $region27: #{qvalue_forward.1} parent=0 // pred_check_branch
    %28 = sbr.rel (0) target = $region29
  $region28: #{qvalue_forward.1} parent=0 // pred_region
    _
  $region29: #{qvalue_forward.1} parent=0 // pred_fallthru
    _
  // Predicated region
  $region30: #{qvalue_forward.1} parent=0 // pred_check
    _
  $region31: #{qvalue_forward.1} parent=0 // pred_check_branch
    %30 = sbr.rel (0) target = $region33
  $region32: #{qvalue_forward.1} parent=0 // pred_region
    _
  $region33: #{qvalue_forward.1} parent=0 // pred_fallthru
    _
  // Predicated region
  $region34: #{qvalue_forward.1} parent=0 // pred_check
    _
  $region35: #{qvalue_forward.1} parent=0 // pred_check_branch
    %32 = sbr.rel (0) target = $region37
  $region36: #{qvalue_forward.1} parent=0 // pred_region
    _
  $region37: #{qvalue_forward.1} parent=0 // pred_fallthru
    _
  // Predicated region
  $region38: #{qvalue_forward.1} parent=0 // pred_check
    _
  $region39: #{qvalue_forward.1} parent=0 // pred_check_branch
    %34 = sbr.rel (0) target = $region41
  $region40: #{qvalue_forward.1} parent=0 // pred_region
    _
  $region41: #{qvalue_forward.1} parent=0 // pred_fallthru
    _
  %v35 = vld [vmem:[%s3] sm:$0xff]
  %v36 = vld [vmem:[%s3 + $0x8] sm:$0xff]
  %v37 = vld [vmem:[%s3 + $0x10] sm:$0xff]
  %v38 = vld [vmem:[%s3 + $0x18] sm:$0xff]
  %v39 = vld [vmem:[%s3 + $0x20] sm:$0xff]
  %v40 = vld [vmem:[%s3 + $0x28] sm:$0xff]
  %v41 = vld [vmem:[%s3 + $0x30] sm:$0xff]
  %v42 = vld [vmem:[%s3 + $0x38] sm:$0xff]
  %v43 = vld [vmem:[%s0] sm:$0xff]
  %v44 = vld [vmem:[%s0 + $0x8] sm:$0xff]
  %v45 = vld [vmem:[%s4] sm:$0xff]
  %v46 = vld [vmem:[%s4 + $0x8] sm:$0xff]
  %v47 = vld [vmem:[%s4 + $0x10] sm:$0xff]
  %v48 = vld [vmem:[%s4 + $0x18] sm:$0xff]
  %v49 = vld [vmem:[%s4 + $0x20] sm:$0xff]
  %v50 = vld [vmem:[%s4 + $0x28] sm:$0xff]
  %v51 = vld [vmem:[%s4 + $0x30] sm:$0xff]
  %v52 = vld [vmem:[%s4 + $0x38] sm:$0xff]
  %v53 = vld [vmem:[%s1] sm:$0x3]
  %vm54 = vcmask 15360
  %v56 = vsel %vm54, %v45, 0
  %v59 = vsel %vm54, %v46, 0
  %v62 = vsel %vm54, %v47, 0
  %v65 = vsel %vm54, %v48, 0
  %v68 = vsel %vm54, %v49, 0
  %v71 = vsel %vm54, %v50, 0
  %v74 = vsel %vm54, %v51, 0
  %v77 = vsel %vm54, %v52, 0
  %vm79 = vcmask 1041408
  %v81 = vsel %vm79, %v53, 0
  %83 = vmatprep.subr.mxu0 0.0
  %84 = vmatpush1.msra.mxu0 %v81
  %85 = vmatprep.subr.mxu0 0.0
  %86 = vmatpush1.msra.mxu0 0.0
  %87 = vmatprep.subr.mxu0 0.0
  %88 = vmatpush1.msra.mxu0 0.0
  %89 = vmatprep.subr.mxu0 0.0
  %90 = vmatpush1.msra.mxu0 0.0
  %91 = vmatprep.subr.mxu0 0.0
  %92 = vmatpush1.msra.mxu0 0.0
  %93 = vmatprep.subr.mxu0 0.0
  %94 = vmatpush1.msra.mxu0 0.0
  %95 = vmatprep.subr.mxu0 0.0
  %96 = vmatpush1.msra.mxu0 0.0
  %97 = vmatprep.subr.mxu0 0.0
  %98 = vmatpush1.msra.mxu0 0.0
  %99 = vmatprep.subr.mxu0 0.0
  %100 = vmatpush1.msra.mxu0 0.0
  %101 = vmatprep.subr.mxu0 0.0
  %102 = vmatpush1.msra.mxu0 0.0
  %103 = vmatprep.subr.mxu0 0.0
  %104 = vmatpush1.msra.mxu0 0.0
  %105 = vmatprep.subr.mxu0 0.0
  %106 = vmatpush1.msra.mxu0 0.0
  %107 = vmatprep.subr.mxu0 0.0
  %108 = vmatpush1.msra.mxu0 0.0
  %109 = vmatprep.subr.mxu0 0.0
  %110 = vmatpush1.msra.mxu0 0.0
  %111 = vmatprep.subr.mxu0 0.0
  %112 = vmatpush1.msra.mxu0 0.0
  %113 = vmatprep.subr.mxu0 0.0
  %114 = vmatpush1.msra.mxu0 0.0
  %115 = vmatprep.subr.mxu0 0.0
  %116 = vmatpush1.msra.mxu0 0.0
  %117 = vmatprep.subr.mxu0 0.0
  %118 = vmatpush1.msra.mxu0 0.0
  %119 = vmatprep.subr.mxu0 0.0
  %120 = vmatpush1.msra.mxu0 0.0
  %121 = vmatprep.subr.mxu0 0.0
  %122 = vmatpush1.msra.mxu0 0.0
  %123 = vmatprep.subr.mxu0 0.0
  %124 = vmatpush1.msra.mxu0 0.0
  %125 = vmatprep.subr.mxu0 0.0
  %126 = vmatpush1.msra.mxu0 0.0
  %127 = vmatprep.subr.mxu0 0.0
  %128 = vmatpush1.msra.mxu0 0.0
  %129 = vmatprep.subr.mxu0 0.0
  %130 = vmatpush1.msra.mxu0 0.0
  %131 = vmatprep.subr.mxu0 0.0
  %132 = vmatpush1.msra.mxu0 0.0
  %133 = vmatprep.subr.mxu0 0.0
  %134 = vmatpush1.msra.mxu0 0.0
  %135 = vmatprep.subr.mxu0 0.0
  %136 = vmatpush1.msra.mxu0 0.0
  %137 = vmatprep.subr.mxu0 0.0
  %138 = vmatpush1.msra.mxu0 0.0
  %139 = vmatprep.subr.mxu0 0.0
  %140 = vmatpush1.msra.mxu0 0.0
  %141 = vmatprep.subr.mxu0 0.0
  %142 = vmatpush1.msra.mxu0 0.0
  %143 = vmatprep.subr.mxu0 0.0
  %144 = vmatpush1.msra.mxu0 0.0
  %145 = vmatprep.subr.mxu0 0.0
  %146 = vmatpush1.msra.mxu0 0.0
  %147 = vmatprep.mubr.f32.mxu0 0.0
  %148 = vmatmul.mubr.f32.gmra.mrb[0].mxu0 %v56
  %v149 = vpop.f32.mrb[0].mxu0
  %v150 = vadd.f32 0.0, %v149
  %v151 = vpop.f32.mrb[0].mxu0
  %152 = vmatprep.mubr.f32.mxu0 0.0
  %153 = vmatmul.mubr.f32.gmra.mrb[0].mxu0 %v59
  %v154 = vpop.f32.mrb[0].mxu0
  %v155 = vadd.f32 0.0, %v154
  %v156 = vpop.f32.mrb[0].mxu0
  %157 = vmatprep.mubr.f32.mxu0 0.0
  %158 = vmatmul.mubr.f32.gmra.mrb[0].mxu0 %v62
  %v159 = vpop.f32.mrb[0].mxu0
  %v160 = vadd.f32 0.0, %v159
  %v161 = vpop.f32.mrb[0].mxu0
  %162 = vmatprep.mubr.f32.mxu0 0.0
  %163 = vmatmul.mubr.f32.gmra.mrb[0].mxu0 %v65
  %v164 = vpop.f32.mrb[0].mxu0
  %v165 = vadd.f32 0.0, %v164
  %v166 = vpop.f32.mrb[0].mxu0
  %167 = vmatprep.mubr.f32.mxu0 0.0
  %168 = vmatmul.mubr.f32.gmra.mrb[0].mxu0 %v68
  %v169 = vpop.f32.mrb[0].mxu0
  %v170 = vadd.f32 0.0, %v169
  %v171 = vpop.f32.mrb[0].mxu0
  %172 = vmatprep.mubr.f32.mxu0 0.0
  %173 = vmatmul.mubr.f32.gmra.mrb[0].mxu0 %v71
  %v174 = vpop.f32.mrb[0].mxu0
  %v175 = vadd.f32 0.0, %v174
  %v176 = vpop.f32.mrb[0].mxu0
  %177 = vmatprep.mubr.f32.mxu0 0.0
  %178 = vmatmul.mubr.f32.gmra.mrb[0].mxu0 %v74
  %v179 = vpop.f32.mrb[0].mxu0
  %v180 = vadd.f32 0.0, %v179
  %v181 = vpop.f32.mrb[0].mxu0
  %182 = vmatprep.mubr.f32.mxu0 0.0
  %183 = vmatmul.mubr.f32.gmra.mrb[0].mxu0 %v77
  %v184 = vpop.f32.mrb[0].mxu0
  %v185 = vadd.f32 0.0, %v184
  %v186 = vpop.f32.mrb[0].mxu0
  %187 = vdwg.mxu0
  %vm188 = vcmask 130048
  %v190 = vsel %vm188, %v35, 0
  %v193 = vsel %vm188, %v36, 0
  %v196 = vsel %vm188, %v37, 0
  %v199 = vsel %vm188, %v38, 0
  %v202 = vsel %vm188, %v39, 0
  %v205 = vsel %vm188, %v40, 0
  %v208 = vsel %vm188, %v41, 0
  %v211 = vsel %vm188, %v42, 0
  %213 = vmatprep.subr.mxu0 0.0
  %214 = vmatpush1.msra.mxu0 %v43
  %215 = vmatprep.subr.mxu0 0.0
  %216 = vmatpush1.msra.mxu0 %v44
  %217 = vmatprep.subr.mxu0 0.0
  %218 = vmatpush1.msra.mxu0 0.0
  %219 = vmatprep.subr.mxu0 0.0
  %220 = vmatpush1.msra.mxu0 0.0
  %221 = vmatprep.subr.mxu0 0.0
  %222 = vmatpush1.msra.mxu0 0.0
  %223 = vmatprep.subr.mxu0 0.0
  %224 = vmatpush1.msra.mxu0 0.0
  %225 = vmatprep.subr.mxu0 0.0
  %226 = vmatpush1.msra.mxu0 0.0
  %227 = vmatprep.subr.mxu0 0.0
  %228 = vmatpush1.msra.mxu0 0.0
  %229 = vmatprep.subr.mxu0 0.0
  %230 = vmatpush1.msra.mxu0 0.0
  %231 = vmatprep.subr.mxu0 0.0
  %232 = vmatpush1.msra.mxu0 0.0
  %233 = vmatprep.subr.mxu0 0.0
  %234 = vmatpush1.msra.mxu0 0.0
  %235 = vmatprep.subr.mxu0 0.0
  %236 = vmatpush1.msra.mxu0 0.0
  %237 = vmatprep.subr.mxu0 0.0
  %238 = vmatpush1.msra.mxu0 0.0
  %239 = vmatprep.subr.mxu0 0.0
  %240 = vmatpush1.msra.mxu0 0.0
  %241 = vmatprep.subr.mxu0 0.0
  %242 = vmatpush1.msra.mxu0 0.0
  %243 = vmatprep.subr.mxu0 0.0
  %244 = vmatpush1.msra.mxu0 0.0
  %245 = vmatprep.subr.mxu0 0.0
  %246 = vmatpush1.msra.mxu0 0.0
  %247 = vmatprep.subr.mxu0 0.0
  %248 = vmatpush1.msra.mxu0 0.0
  %249 = vmatprep.subr.mxu0 0.0
  %250 = vmatpush1.msra.mxu0 0.0
  %251 = vmatprep.subr.mxu0 0.0
  %252 = vmatpush1.msra.mxu0 0.0
  %253 = vmatprep.subr.mxu0 0.0
  %254 = vmatpush1.msra.mxu0 0.0
  %255 = vmatprep.subr.mxu0 0.0
  %256 = vmatpush1.msra.mxu0 0.0
  %257 = vmatprep.subr.mxu0 0.0
  %258 = vmatpush1.msra.mxu0 0.0
  %259 = vmatprep.subr.mxu0 0.0
  %260 = vmatpush1.msra.mxu0 0.0
  %261 = vmatprep.subr.mxu0 0.0
  %262 = vmatpush1.msra.mxu0 0.0
  %263 = vmatprep.subr.mxu0 0.0
  %264 = vmatpush1.msra.mxu0 0.0
  %265 = vmatprep.subr.mxu0 0.0
  %266 = vmatpush1.msra.mxu0 0.0
  %267 = vmatprep.subr.mxu0 0.0
  %268 = vmatpush1.msra.mxu0 0.0
  %269 = vmatprep.subr.mxu0 0.0
  %270 = vmatpush1.msra.mxu0 0.0
  %271 = vmatprep.subr.mxu0 0.0
  %272 = vmatpush1.msra.mxu0 0.0
  %273 = vmatprep.subr.mxu0 0.0
  %274 = vmatpush1.msra.mxu0 0.0
  %275 = vmatprep.subr.mxu0 0.0
  %276 = vmatpush1.msra.mxu0 0.0
  %277 = vmatprep.mubr.f32.mxu0 0.0
  %278 = vmatmul.mubr.f32.gmra.mrb[0].mxu0 %v190
  %v279 = vpop.f32.mrb[0].mxu0
  %v280 = vadd.f32 %v150, %v279
  %v281 = vpop.f32.mrb[0].mxu0
  %282 = vmatprep.mubr.f32.mxu0 0.0
  %283 = vmatmul.mubr.f32.gmra.mrb[0].mxu0 %v193
  %v284 = vpop.f32.mrb[0].mxu0
  %v285 = vadd.f32 %v155, %v284
  %v286 = vpop.f32.mrb[0].mxu0
  %287 = vmatprep.mubr.f32.mxu0 0.0
  %288 = vmatmul.mubr.f32.gmra.mrb[0].mxu0 %v196
  %v289 = vpop.f32.mrb[0].mxu0
  %v290 = vadd.f32 %v160, %v289
  %v291 = vpop.f32.mrb[0].mxu0
  %292 = vmatprep.mubr.f32.mxu0 0.0
  %293 = vmatmul.mubr.f32.gmra.mrb[0].mxu0 %v199
  %v294 = vpop.f32.mrb[0].mxu0
  %v295 = vadd.f32 %v165, %v294
  %v296 = vpop.f32.mrb[0].mxu0
  %297 = vmatprep.mubr.f32.mxu0 0.0
  %298 = vmatmul.mubr.f32.gmra.mrb[0].mxu0 %v202
  %v299 = vpop.f32.mrb[0].mxu0
  %v300 = vadd.f32 %v170, %v299
  %v301 = vpop.f32.mrb[0].mxu0
  %302 = vmatprep.mubr.f32.mxu0 0.0
  %303 = vmatmul.mubr.f32.gmra.mrb[0].mxu0 %v205
  %v304 = vpop.f32.mrb[0].mxu0
  %v305 = vadd.f32 %v175, %v304
  %v306 = vpop.f32.mrb[0].mxu0
  %307 = vmatprep.mubr.f32.mxu0 0.0
  %308 = vmatmul.mubr.f32.gmra.mrb[0].mxu0 %v208
  %v309 = vpop.f32.mrb[0].mxu0
  %v310 = vadd.f32 %v180, %v309
  %v311 = vpop.f32.mrb[0].mxu0
  %312 = vmatprep.mubr.f32.mxu0 0.0
  %313 = vmatmul.mubr.f32.gmra.mrb[0].mxu0 %v211
  %v314 = vpop.f32.mrb[0].mxu0
  %v315 = vadd.f32 %v185, %v314
  %v316 = vpop.f32.mrb[0].mxu0
  %317 = vdwg.mxu0
  %v318 = vld [vmem:[%s5] sm:$0xff]
  %v319 = vld [vmem:[%s5 + $0x8] sm:$0xff]
  %v320 = vld [vmem:[%s5 + $0x10] sm:$0xff]
  %v321 = vld [vmem:[%s5 + $0x18] sm:$0xff]
  %v322 = vld [vmem:[%s5 + $0x20] sm:$0xff]
  %v323 = vld [vmem:[%s5 + $0x28] sm:$0xff]
  %v324 = vld [vmem:[%s5 + $0x30] sm:$0xff]
  %v325 = vld [vmem:[%s5 + $0x38] sm:$0xff]
  %327 = vset.pattern.permute.xlu0 0
  %328 = vperm.xlu0 %327, %v318
  %v329 = vpop.permute.xlu0 %328
  %332 = vset.pattern.permute.xlu0 0
  %333 = vperm.xlu0 %332, %v319
  %v334 = vpop.permute.xlu0 %333
  %337 = vset.pattern.permute.xlu0 0
  %338 = vperm.xlu0 %337, %v320
  %v339 = vpop.permute.xlu0 %338
  %342 = vset.pattern.permute.xlu0 0
  %343 = vperm.xlu0 %342, %v321
  %v344 = vpop.permute.xlu0 %343
  %347 = vset.pattern.permute.xlu0 0
  %348 = vperm.xlu0 %347, %v322
  %v349 = vpop.permute.xlu0 %348
  %352 = vset.pattern.permute.xlu0 0
  %353 = vperm.xlu0 %352, %v323
  %v354 = vpop.permute.xlu0 %353
  %357 = vset.pattern.permute.xlu0 0
  %358 = vperm.xlu0 %357, %v324
  %v359 = vpop.permute.xlu0 %358
  %362 = vset.pattern.permute.xlu0 0
  %363 = vperm.xlu0 %362, %v325
  %v364 = vpop.permute.xlu0 %363
  %v366 = vadd.f32 %v280, %v329
  %v367 = vadd.f32 %v285, %v334
  %v368 = vadd.f32 %v290, %v339
  %v369 = vadd.f32 %v295, %v344
  %v370 = vadd.f32 %v300, %v349
  %v371 = vadd.f32 %v305, %v354
  %v372 = vadd.f32 %v310, %v359
  %v373 = vadd.f32 %v315, %v364
  %v374 = vmax.f32 %v366, 0.0
  %v375 = vmax.f32 %v367, 0.0
  %v376 = vmax.f32 %v368, 0.0
  %v377 = vmax.f32 %v369, 0.0
  %v378 = vmax.f32 %v370, 0.0
  %v379 = vmax.f32 %v371, 0.0
  %v380 = vmax.f32 %v372, 0.0
  %v381 = vmax.f32 %v373, 0.0
  %v382 = vld [vmem:[%s6] sm:$0xff]
  %v383 = vld [vmem:[%s6 + $0x8] sm:$0xff]
  %v384 = vld [vmem:[%s6 + $0x10] sm:$0xff]
  %v385 = vld [vmem:[%s6 + $0x18] sm:$0xff]
  %v386 = vld [vmem:[%s6 + $0x20] sm:$0xff]
  %v387 = vld [vmem:[%s6 + $0x28] sm:$0xff]
  %v388 = vld [vmem:[%s6 + $0x30] sm:$0xff]
  %v389 = vld [vmem:[%s6 + $0x38] sm:$0xff]
  %v390 = vld [vmem:[%s7] sm:$0xff]
  %v391 = vld [vmem:[%s7 + $0x8] sm:$0xff]
  %v392 = vld [vmem:[%s7 + $0x10] sm:$0xff]
  %v393 = vld [vmem:[%s7 + $0x18] sm:$0xff]
  %v394 = vld [vmem:[%s7 + $0x20] sm:$0xff]
  %v395 = vld [vmem:[%s7 + $0x28] sm:$0xff]
  %v396 = vld [vmem:[%s7 + $0x30] sm:$0xff]
  %v397 = vld [vmem:[%s7 + $0x38] sm:$0xff]
  %399 = vset.pattern.permute.xlu0 0
  %400 = vperm.xlu0 %399, %v390
  %v401 = vpop.permute.xlu0 %400
  %404 = vset.pattern.permute.xlu0 0
  %405 = vperm.xlu0 %404, %v391
  %v406 = vpop.permute.xlu0 %405
  %409 = vset.pattern.permute.xlu0 0
  %410 = vperm.xlu0 %409, %v392
  %v411 = vpop.permute.xlu0 %410
  %414 = vset.pattern.permute.xlu0 0
  %415 = vperm.xlu0 %414, %v393
  %v416 = vpop.permute.xlu0 %415
  %419 = vset.pattern.permute.xlu0 0
  %420 = vperm.xlu0 %419, %v394
  %v421 = vpop.permute.xlu0 %420
  %424 = vset.pattern.permute.xlu0 0
  %425 = vperm.xlu0 %424, %v395
  %v426 = vpop.permute.xlu0 %425
  %429 = vset.pattern.permute.xlu0 0
  %430 = vperm.xlu0 %429, %v396
  %v431 = vpop.permute.xlu0 %430
  %434 = vset.pattern.permute.xlu0 0
  %435 = vperm.xlu0 %434, %v397
  %v436 = vpop.permute.xlu0 %435
  %vm438 = vcmask 523264
  %v440 = vsel %vm438, %v382, 0
  %v443 = vsel %vm438, %v383, 0
  %v446 = vsel %vm438, %v384, 0
  %v449 = vsel %vm438, %v385, 0
  %v452 = vsel %vm438, %v386, 0
  %v455 = vsel %vm438, %v387, 0
  %v458 = vsel %vm438, %v388, 0
  %v461 = vsel %vm438, %v389, 0
  %463 = vmatprep.subr.mxu0 0.0
  %464 = vmatpush1.msra.mxu0 %v374
  %465 = vmatprep.subr.mxu0 0.0
  %466 = vmatpush1.msra.mxu0 %v375
  %467 = vmatprep.subr.mxu0 0.0
  %468 = vmatpush1.msra.mxu0 %v376
  %469 = vmatprep.subr.mxu0 0.0
  %470 = vmatpush1.msra.mxu0 %v377
  %471 = vmatprep.subr.mxu0 0.0
  %472 = vmatpush1.msra.mxu0 %v378
  %473 = vmatprep.subr.mxu0 0.0
  %474 = vmatpush1.msra.mxu0 %v379
  %475 = vmatprep.subr.mxu0 0.0
  %476 = vmatpush1.msra.mxu0 %v380
  %477 = vmatprep.subr.mxu0 0.0
  %478 = vmatpush1.msra.mxu0 %v381
  %479 = vmatprep.subr.mxu0 0.0
  %480 = vmatpush1.msra.mxu0 0.0
  %481 = vmatprep.subr.mxu0 0.0
  %482 = vmatpush1.msra.mxu0 0.0
  %483 = vmatprep.subr.mxu0 0.0
  %484 = vmatpush1.msra.mxu0 0.0
  %485 = vmatprep.subr.mxu0 0.0
  %486 = vmatpush1.msra.mxu0 0.0
  %487 = vmatprep.subr.mxu0 0.0
  %488 = vmatpush1.msra.mxu0 0.0
  %489 = vmatprep.subr.mxu0 0.0
  %490 = vmatpush1.msra.mxu0 0.0
  %491 = vmatprep.subr.mxu0 0.0
  %492 = vmatpush1.msra.mxu0 0.0
  %493 = vmatprep.subr.mxu0 0.0
  %494 = vmatpush1.msra.mxu0 0.0
  %495 = vmatprep.subr.mxu0 0.0
  %496 = vmatpush1.msra.mxu0 0.0
  %497 = vmatprep.subr.mxu0 0.0
  %498 = vmatpush1.msra.mxu0 0.0
  %499 = vmatprep.subr.mxu0 0.0
  %500 = vmatpush1.msra.mxu0 0.0
  %501 = vmatprep.subr.mxu0 0.0
  %502 = vmatpush1.msra.mxu0 0.0
  %503 = vmatprep.subr.mxu0 0.0
  %504 = vmatpush1.msra.mxu0 0.0
  %505 = vmatprep.subr.mxu0 0.0
  %506 = vmatpush1.msra.mxu0 0.0
  %507 = vmatprep.subr.mxu0 0.0
  %508 = vmatpush1.msra.mxu0 0.0
  %509 = vmatprep.subr.mxu0 0.0
  %510 = vmatpush1.msra.mxu0 0.0
  %511 = vmatprep.subr.mxu0 0.0
  %512 = vmatpush1.msra.mxu0 0.0
  %513 = vmatprep.subr.mxu0 0.0
  %514 = vmatpush1.msra.mxu0 0.0
  %515 = vmatprep.subr.mxu0 0.0
  %516 = vmatpush1.msra.mxu0 0.0
  %517 = vmatprep.subr.mxu0 0.0
  %518 = vmatpush1.msra.mxu0 0.0
  %519 = vmatprep.subr.mxu0 0.0
  %520 = vmatpush1.msra.mxu0 0.0
  %521 = vmatprep.subr.mxu0 0.0
  %522 = vmatpush1.msra.mxu0 0.0
  %523 = vmatprep.subr.mxu0 0.0
  %524 = vmatpush1.msra.mxu0 0.0
  %525 = vmatprep.subr.mxu0 0.0
  %526 = vmatpush1.msra.mxu0 0.0
  %527 = vmatprep.mubr.f32.mxu0 0.0
  %528 = vmatmul.mubr.f32.gmra.mrb[0].mxu0 %v440
  %v529 = vpop.f32.mrb[0].mxu0
  %v530 = vadd.f32 %v401, %v529
  %v531 = vpop.f32.mrb[0].mxu0
  %532 = vmatprep.mubr.f32.mxu0 0.0
  %533 = vmatmul.mubr.f32.gmra.mrb[0].mxu0 %v443
  %v534 = vpop.f32.mrb[0].mxu0
  %v535 = vadd.f32 %v406, %v534
  %v536 = vpop.f32.mrb[0].mxu0
  %537 = vmatprep.mubr.f32.mxu0 0.0
  %538 = vmatmul.mubr.f32.gmra.mrb[0].mxu0 %v446
  %v539 = vpop.f32.mrb[0].mxu0
  %v540 = vadd.f32 %v411, %v539
  %v541 = vpop.f32.mrb[0].mxu0
  %542 = vmatprep.mubr.f32.mxu0 0.0
  %543 = vmatmul.mubr.f32.gmra.mrb[0].mxu0 %v449
  %v544 = vpop.f32.mrb[0].mxu0
  %v545 = vadd.f32 %v416, %v544
  %v546 = vpop.f32.mrb[0].mxu0
  %547 = vmatprep.mubr.f32.mxu0 0.0
  %548 = vmatmul.mubr.f32.gmra.mrb[0].mxu0 %v452
  %v549 = vpop.f32.mrb[0].mxu0
  %v550 = vadd.f32 %v421, %v549
  %v551 = vpop.f32.mrb[0].mxu0
  %552 = vmatprep.mubr.f32.mxu0 0.0
  %553 = vmatmul.mubr.f32.gmra.mrb[0].mxu0 %v455
  %v554 = vpop.f32.mrb[0].mxu0
  %v555 = vadd.f32 %v426, %v554
  %v556 = vpop.f32.mrb[0].mxu0
  %557 = vmatprep.mubr.f32.mxu0 0.0
  %558 = vmatmul.mubr.f32.gmra.mrb[0].mxu0 %v458
  %v559 = vpop.f32.mrb[0].mxu0
  %v560 = vadd.f32 %v431, %v559
  %v561 = vpop.f32.mrb[0].mxu0
  %562 = vmatprep.mubr.f32.mxu0 0.0
  %563 = vmatmul.mubr.f32.gmra.mrb[0].mxu0 %v461
  %v564 = vpop.f32.mrb[0].mxu0
  %v565 = vadd.f32 %v436, %v564
  %v566 = vpop.f32.mrb[0].mxu0
  %567 = vdwg.mxu0
  %v568 = vmax.f32 %v530, 0.0
  %v569 = vmax.f32 %v535, 0.0
  %v570 = vmax.f32 %v540, 0.0
  %v571 = vmax.f32 %v545, 0.0
  %v572 = vmax.f32 %v550, 0.0
  %v573 = vmax.f32 %v555, 0.0
  %v574 = vmax.f32 %v560, 0.0
  %v575 = vmax.f32 %v565, 0.0
  %v576 = vld [vmem:[%s8] sm:$0x7]
  %v577 = vld [vmem:[%s9] sm:$0x7]
  %579 = vset.pattern.permute.xlu0 0
  %580 = vperm.xlu0 %579, %v577
  %v581 = vpop.permute.xlu0 %580
  %v584 = vsel %vm438, %v576, 0
  %586 = vmatprep.subr.mxu0 0.0
  %587 = vmatpush1.msra.mxu0 %v568
  %588 = vmatprep.subr.mxu0 0.0
  %589 = vmatpush1.msra.mxu0 %v569
  %590 = vmatprep.subr.mxu0 0.0
  %591 = vmatpush1.msra.mxu0 %v570
  %592 = vmatprep.subr.mxu0 0.0
  %593 = vmatpush1.msra.mxu0 %v571
  %594 = vmatprep.subr.mxu0 0.0
  %595 = vmatpush1.msra.mxu0 %v572
  %596 = vmatprep.subr.mxu0 0.0
  %597 = vmatpush1.msra.mxu0 %v573
  %598 = vmatprep.subr.mxu0 0.0
  %599 = vmatpush1.msra.mxu0 %v574
  %600 = vmatprep.subr.mxu0 0.0
  %601 = vmatpush1.msra.mxu0 %v575
  %602 = vmatprep.subr.mxu0 0.0
  %603 = vmatpush1.msra.mxu0 0.0
  %604 = vmatprep.subr.mxu0 0.0
  %605 = vmatpush1.msra.mxu0 0.0
  %606 = vmatprep.subr.mxu0 0.0
  %607 = vmatpush1.msra.mxu0 0.0
  %608 = vmatprep.subr.mxu0 0.0
  %609 = vmatpush1.msra.mxu0 0.0
  %610 = vmatprep.subr.mxu0 0.0
  %611 = vmatpush1.msra.mxu0 0.0
  %612 = vmatprep.subr.mxu0 0.0
  %613 = vmatpush1.msra.mxu0 0.0
  %614 = vmatprep.subr.mxu0 0.0
  %615 = vmatpush1.msra.mxu0 0.0
  %616 = vmatprep.subr.mxu0 0.0
  %617 = vmatpush1.msra.mxu0 0.0
  %618 = vmatprep.subr.mxu0 0.0
  %619 = vmatpush1.msra.mxu0 0.0
  %620 = vmatprep.subr.mxu0 0.0
  %621 = vmatpush1.msra.mxu0 0.0
  %622 = vmatprep.subr.mxu0 0.0
  %623 = vmatpush1.msra.mxu0 0.0
  %624 = vmatprep.subr.mxu0 0.0
  %625 = vmatpush1.msra.mxu0 0.0
  %626 = vmatprep.subr.mxu0 0.0
  %627 = vmatpush1.msra.mxu0 0.0
  %628 = vmatprep.subr.mxu0 0.0
  %629 = vmatpush1.msra.mxu0 0.0
  %630 = vmatprep.subr.mxu0 0.0
  %631 = vmatpush1.msra.mxu0 0.0
  %632 = vmatprep.subr.mxu0 0.0
  %633 = vmatpush1.msra.mxu0 0.0
  %634 = vmatprep.subr.mxu0 0.0
  %635 = vmatpush1.msra.mxu0 0.0
  %636 = vmatprep.subr.mxu0 0.0
  %637 = vmatpush1.msra.mxu0 0.0
  %638 = vmatprep.subr.mxu0 0.0
  %639 = vmatpush1.msra.mxu0 0.0
  %640 = vmatprep.subr.mxu0 0.0
  %641 = vmatpush1.msra.mxu0 0.0
  %642 = vmatprep.subr.mxu0 0.0
  %643 = vmatpush1.msra.mxu0 0.0
  %644 = vmatprep.subr.mxu0 0.0
  %645 = vmatpush1.msra.mxu0 0.0
  %646 = vmatprep.subr.mxu0 0.0
  %647 = vmatpush1.msra.mxu0 0.0
  %648 = vmatprep.subr.mxu0 0.0
  %649 = vmatpush1.msra.mxu0 0.0
  %650 = vmatprep.mubr.f32.mxu0 0.0
  %651 = vmatmul.mubr.f32.gmra.mrb[0].mxu0 %v584
  %v652 = vpop.f32.mrb[0].mxu0
  %v653 = vadd.f32 %v581, %v652
  %v654 = vpop.f32.mrb[0].mxu0
  %655 = vdwg.mxu0
  %v656 = vld [vmem:[%s2] sm:$0x1]
  %vm657 = vcmp.eq.s32.totalorder %v656, 0
  %vm658 = vcmp.eq.s32.totalorder %v656, 1
  %v661 = vunpack.c.l.s4 1966171168
  %v662 = vunpack.c.0.s8 %v661
  %v663 = vlaneseq
  %v664 = vshrl.u32 %v663, 7
  %v665 = vsub.s32 %v662, %v664
  %v666 = vrot.slane %v653, %v665
  %v667 = vcombine.high %v666, %v666
  %v669 = vunpack.c.l.s4 1966171168
  %v670 = vunpack.c.0.s8 %v669
  %v671 = vlaneseq
  %v672 = vshrl.u32 %v671, 7
  %v673 = vsub.s32 %v670, %v672
  %v674 = vrot.slane %v666, %v673
  %v676 = vunpack.c.l.s4 1966171168
  %v677 = vunpack.c.0.s8 %v676
  %v678 = vlaneseq
  %v679 = vshrl.u32 %v678, 7
  %v680 = vsub.s32 %v677, %v679
  %v681 = vrot.slane %v667, %v680
  %v683 = vcombine.high %v674, %v674
  %v685 = vsel %vm658, %v681, %v683
  %v686 = vsel %vm657, %v653, %v685
  %687 = vst [vmem:[%s10] sm:$0x1] %v686
  // Predicated region
  $region42: #{qvalue_forward.1} parent=0 // pred_check
    _
  $region43: #{qvalue_forward.1} parent=0 // pred_check_branch
    %689 = sbr.rel (0) target = $region45
  $region44: #{qvalue_forward.1} parent=0 // pred_region
    _
  $region45: #{qvalue_forward.1} parent=0 // pred_fallthru
    _
  // Predicated region
  $region46: #{qvalue_forward.1} parent=0 // pred_check
    _
  $region47: #{qvalue_forward.1} parent=0 // pred_check_branch
    %691 = sbr.rel (0) target = $region49
  $region48: #{qvalue_forward.1} parent=0 // pred_region
    _
  $region49: #{qvalue_forward.1} parent=0 // pred_fallthru
    _

</llo_original>
